<compile_context>
chip_gen: v5e
topology: v5e:2x2
jax: 0.10.0
libtpu: 0.0.40
codegen_flags: <defaults>
</compile_context>

<pallas_src>
import jax
import jax.numpy as jnp
from jax.experimental import pallas as pl
from jax.experimental.pallas import tpu as pltpu

C_IN = 1
C_OUT = 2
K = 2  # kernel_size


def fused_conv_kernel(w_ref, b_ref, x_ref, o_ref):
    """Single effective 2x2 valid conv (w = w1+w2, b = b1+b2), C_in = 1.

    w_ref : (C_OUT*K*K,)              f32 in SMEM  (scalar prefetch, [c,kh,kw])
    b_ref : (C_OUT,)                  f32 in SMEM  (scalar prefetch)
    x_ref : (B_tile, H, W)            f32 in VMEM  (batch tile)
    o_ref : (B_tile, C_OUT, OH, OW)   f32 in VMEM
    """
    x = x_ref[...]                                   # (B, H, W)
    B, H, W = x.shape
    OH, OW = H - K + 1, W - K + 1

    # Hoist the scalar SMEM reads out of the FMA chain.
    w = [w_ref[i] for i in range(C_OUT * K * K)]
    b = [b_ref[c] for c in range(C_OUT)]

    # Shifted patches are independent of the output channel: materialize once.
    patches = [x[:, kh:kh + OH, kw:kw + OW]          # K*K = 4 static slices
               for kh in range(K) for kw in range(K)]

    for c in range(C_OUT):                           # tiny static loop (C_OUT=2)
        acc = jnp.full((B, OH, OW), b[c], jnp.float32)   # start from bias
        for i in range(K * K):
            acc = acc + patches[i] * w[c * K * K + i]    # scalar broadcast FMA
        o_ref[:, c, :, :] = acc                      # direct per-channel store


def model_forward(x_nchw, w1, b1, w2, b2):
    """x_nchw: (N, 1, H, W); w*: (2, 1, 2, 2); b*: (2,). Returns (N, 2, H-1, W-1)."""
    N, C, H, W = x_nchw.shape
    assert C == C_IN == 1
    OH, OW = H - K + 1, W - K + 1

    x = x_nchw[:, 0, :, :].astype(jnp.float32)       # squeeze C_in = 1

    # Algebraic fusion: conv1(x)+conv2(x) == conv(x; w1+w2) + (b1+b2).
    # (Benign FP reassociation, well within test tolerance.)
    w_eff = (w1.astype(jnp.float32) + w2.astype(jnp.float32)).reshape(-1)
    b_eff = b1.astype(jnp.float32) + b2.astype(jnp.float32)

    # Batch tiling: whole batch in one step for small N; large tiles otherwise.
    # Per-step VMEM (double-buffered):
    #   2 * B_tile * (H*W + C_OUT*OH*OW) * 4 B  -> ~6 MiB at B_tile=1024, 16x16,
    # comfortably inside v7x's 64 MiB as well as v5e/v6e's 128 MiB.
    B_tile = min(N, 512)
    grid_n = pl.cdiv(N, B_tile)

    # Only shard the batch across TensorCores when each core has real work.
    dim_sem = ("parallel",) if grid_n > 1 else ("arbitrary",)

    flops = 2 * N * C_OUT * OH * OW * K * K
    bytes_accessed = 4 * (N * H * W + N * C_OUT * OH * OW + w_eff.size + b_eff.size)

    return pl.pallas_call(
        fused_conv_kernel,
        out_shape=jax.ShapeDtypeStruct((N, C_OUT, OH, OW), jnp.float32),
        grid_spec=pltpu.PrefetchScalarGridSpec(
            num_scalar_prefetch=2,                   # w_eff, b_eff -> SMEM
            grid=(grid_n,),
            in_specs=[
                pl.BlockSpec((B_tile, H, W), lambda n, w, b: (n, 0, 0)),
            ],
            out_specs=pl.BlockSpec((B_tile, C_OUT, OH, OW),
                                   lambda n, w, b: (n, 0, 0, 0)),
        ),
        compiler_params=pltpu.CompilerParams(dimension_semantics=dim_sem),
        cost_estimate=pl.CostEstimate(
            flops=flops, transcendentals=0, bytes_accessed=bytes_accessed),
    )(w_eff, b_eff, x)


def ref_forward(x, w1, b1, w2, b2):
    """Pure-JAX reference (matches PyTorch Conv2d semantics)."""
    dn = jax.lax.conv_dimension_numbers(x.shape, w1.shape, ("NCHW", "OIHW", "NCHW"))
    y1 = jax.lax.conv_general_dilated(x, w1, (1, 1), "VALID", dimension_numbers=dn)
    y2 = jax.lax.conv_general_dilated(x, w2, (1, 1), "VALID", dimension_numbers=dn)
    return (y1 + b1[None, :, None, None]) + (y2 + b2[None, :, None, None])


if __name__ == "__main__":
    # Deterministic parameter init per create_conv(1, 2, 2, -1, -2):
    #   weight.fill_(-1), bias.fill_(-2) for both convs.
    w1 = jnp.full((C_OUT, C_IN, K, K), -1.0, dtype=jnp.float32)
    b1 = jnp.full((C_OUT,), -2.0, dtype=jnp.float32)
    w2 = jnp.full((C_OUT, C_IN, K, K), -1.0, dtype=jnp.float32)
    b2 = jnp.full((C_OUT,), -2.0, dtype=jnp.float32)

    key = jax.random.PRNGKey(0)
    x = jax.random.normal(key, (2, 1, 16, 16), dtype=jnp.float32)  # NCHW

    out = model_forward(x, w1, b1, w2, b2)
    out = jax.block_until_ready(out)

    ref = ref_forward(x, w1, b1, w2, b2)
    assert out.shape == (2, 2, 15, 15), out.shape
    assert jnp.allclose(out, ref, atol=1e-5, rtol=1e-5), "mismatch vs reference"

    print("KERNEL_OK")
</pallas_src>

<mosaic_0001>
module attributes {stable_mosaic.version = 11 : i64} {
  func.func @fused_conv_kernel(%arg0: i32, %arg1: memref<8xf32, #tpu.memory_space<smem>>, %arg2: memref<2xf32, #tpu.memory_space<smem>>, %arg3: memref<2x16x16xf32, #tpu.memory_space<vmem>>, %arg4: memref<2x2x15x15xf32, #tpu.memory_space<vmem>>) attributes {dimension_semantics = [#tpu.dimension_semantics<arbitrary>], iteration_bounds = array<i64: 1>, scalar_prefetch = 2 : i64, scratch_operands = 0 : i64, tpu.core_type = #tpu.core_type<tc>, window_params = [{transform_indices = @transform_0, window_bounds = array<i64: 2, 16, 16>}, {transform_indices = @transform_1, window_bounds = array<i64: 2, 2, 15, 15>}]} {
    %c0 = arith.constant 0 : index
    %c0_0 = arith.constant 0 : index
    %c0_1 = arith.constant 0 : index
    %0 = vector.load %arg3[%c0, %c0_0, %c0_1] : memref<2x16x16xf32, #tpu.memory_space<vmem>>, vector<2x16x16xf32>
    %c0_2 = arith.constant 0 : index
    %1 = memref.load %arg1[%c0_2] : memref<8xf32, #tpu.memory_space<smem>>
    %c1 = arith.constant 1 : index
    %2 = memref.load %arg1[%c1] : memref<8xf32, #tpu.memory_space<smem>>
    %c2 = arith.constant 2 : index
    %3 = memref.load %arg1[%c2] : memref<8xf32, #tpu.memory_space<smem>>
    %c3 = arith.constant 3 : index
    %4 = memref.load %arg1[%c3] : memref<8xf32, #tpu.memory_space<smem>>
    %c4 = arith.constant 4 : index
    %5 = memref.load %arg1[%c4] : memref<8xf32, #tpu.memory_space<smem>>
    %c5 = arith.constant 5 : index
    %6 = memref.load %arg1[%c5] : memref<8xf32, #tpu.memory_space<smem>>
    %c6 = arith.constant 6 : index
    %7 = memref.load %arg1[%c6] : memref<8xf32, #tpu.memory_space<smem>>
    %c7 = arith.constant 7 : index
    %8 = memref.load %arg1[%c7] : memref<8xf32, #tpu.memory_space<smem>>
    %c0_3 = arith.constant 0 : index
    %9 = memref.load %arg2[%c0_3] : memref<2xf32, #tpu.memory_space<smem>>
    %c1_4 = arith.constant 1 : index
    %10 = memref.load %arg2[%c1_4] : memref<2xf32, #tpu.memory_space<smem>>
    %11 = vector.extract_strided_slice %0 {offsets = [0, 0, 0], sizes = [2, 15, 15], strides = [1, 1, 1]} : vector<2x16x16xf32> to vector<2x15x15xf32>
    %12 = vector.extract_strided_slice %0 {offsets = [0, 0, 1], sizes = [2, 15, 15], strides = [1, 1, 1]} : vector<2x16x16xf32> to vector<2x15x15xf32>
    %13 = vector.extract_strided_slice %0 {offsets = [0, 1, 0], sizes = [2, 15, 15], strides = [1, 1, 1]} : vector<2x16x16xf32> to vector<2x15x15xf32>
    %14 = vector.extract_strided_slice %0 {offsets = [0, 1, 1], sizes = [2, 15, 15], strides = [1, 1, 1]} : vector<2x16x16xf32> to vector<2x15x15xf32>
    %15 = vector.broadcast %9 : f32 to vector<2x15x15xf32>
    %16 = vector.broadcast %1 : f32 to vector<2x15x15xf32>
    %17 = arith.mulf %11, %16 : vector<2x15x15xf32>
    %18 = arith.addf %15, %17 : vector<2x15x15xf32>
    %19 = vector.broadcast %2 : f32 to vector<2x15x15xf32>
    %20 = arith.mulf %12, %19 : vector<2x15x15xf32>
    %21 = arith.addf %18, %20 : vector<2x15x15xf32>
    %22 = vector.broadcast %3 : f32 to vector<2x15x15xf32>
    %23 = arith.mulf %13, %22 : vector<2x15x15xf32>
    %24 = arith.addf %21, %23 : vector<2x15x15xf32>
    %25 = vector.broadcast %4 : f32 to vector<2x15x15xf32>
    %26 = arith.mulf %14, %25 : vector<2x15x15xf32>
    %27 = arith.addf %24, %26 : vector<2x15x15xf32>
    %c0_5 = arith.constant 0 : index
    %c0_6 = arith.constant 0 : index
    %c0_7 = arith.constant 0 : index
    %c0_8 = arith.constant 0 : index
    %28 = vector.load %arg4[%c0_5, %c0_6, %c0_7, %c0_8] : memref<2x2x15x15xf32, #tpu.memory_space<vmem>>, vector<2x1x15x15xf32>
    %29 = vector.shape_cast %28 : vector<2x1x15x15xf32> to vector<2x15x15xf32>
    %30 = vector.shape_cast %27 : vector<2x15x15xf32> to vector<2x1x15x15xf32>
    tpu.vector_store %arg4[%c0_5, %c0_6, %c0_7, %c0_8], %30 {strides = array<i32>} : memref<2x2x15x15xf32, #tpu.memory_space<vmem>>, vector<2x1x15x15xf32>,
    %31 = vector.broadcast %10 : f32 to vector<2x15x15xf32>
    %32 = vector.broadcast %5 : f32 to vector<2x15x15xf32>
    %33 = arith.mulf %11, %32 : vector<2x15x15xf32>
    %34 = arith.addf %31, %33 : vector<2x15x15xf32>
    %35 = vector.broadcast %6 : f32 to vector<2x15x15xf32>
    %36 = arith.mulf %12, %35 : vector<2x15x15xf32>
    %37 = arith.addf %34, %36 : vector<2x15x15xf32>
    %38 = vector.broadcast %7 : f32 to vector<2x15x15xf32>
    %39 = arith.mulf %13, %38 : vector<2x15x15xf32>
    %40 = arith.addf %37, %39 : vector<2x15x15xf32>
    %41 = vector.broadcast %8 : f32 to vector<2x15x15xf32>
    %42 = arith.mulf %14, %41 : vector<2x15x15xf32>
    %43 = arith.addf %40, %42 : vector<2x15x15xf32>
    %c0_9 = arith.constant 0 : index
    %c1_10 = arith.constant 1 : index
    %c0_11 = arith.constant 0 : index
    %c0_12 = arith.constant 0 : index
    %44 = vector.load %arg4[%c0_9, %c1_10, %c0_11, %c0_12] : memref<2x2x15x15xf32, #tpu.memory_space<vmem>>, vector<2x1x15x15xf32>
    %45 = vector.shape_cast %44 : vector<2x1x15x15xf32> to vector<2x15x15xf32>
    %46 = vector.shape_cast %43 : vector<2x15x15xf32> to vector<2x1x15x15xf32>
    tpu.vector_store %arg4[%c0_9, %c1_10, %c0_11, %c0_12], %46 {strides = array<i32>} : memref<2x2x15x15xf32, #tpu.memory_space<vmem>>, vector<2x1x15x15xf32>,
    return
  }
  func.func @transform_0(%arg0: i32, %arg1: memref<8xf32, #tpu.memory_space<smem>>, %arg2: memref<2xf32, #tpu.memory_space<smem>>) -> (i32, i32, i32) {
    %c0_i32 = arith.constant 0 : i32
    %c0_i32_0 = arith.constant 0 : i32
    %c0_i32_1 = arith.constant 0 : i32
    return %arg0, %c0_i32, %c0_i32_0 : i32, i32, i32
  }
  func.func @transform_1(%arg0: i32, %arg1: memref<8xf32, #tpu.memory_space<smem>>, %arg2: memref<2xf32, #tpu.memory_space<smem>>) -> (i32, i32, i32, i32) {
    %c0_i32 = arith.constant 0 : i32
    %c0_i32_0 = arith.constant 0 : i32
    %c0_i32_1 = arith.constant 0 : i32
    %c0_i32_2 = arith.constant 0 : i32
    return %arg0, %c0_i32, %c0_i32_0, %c0_i32_1 : i32, i32, i32, i32
  }
}

</mosaic_0001>

<llo_original>
// kernel: tpu_custom_call.1
$region0: #{tpu_custom_call.1}
  #allocation0 [shape = 'u32[]', space=smem, size = 0x4, offset = 0x4, fixed_abs, tag = 'smem constant byte address 0x4 - core index']
  #allocation1 [shape = 'u32[72,128]{1,0:T(1,128)}', space=vmem, size = 0x9000, scoped, tag = 'internal scratch']
  #allocation2 [shape = 's32[1]{0}', space=sflag, size = 0x4, scoped, tag = 'scoped memory for tpu_custom_call.1']
  #allocation3 [shape = 'u8[512]{0}', space=smem, size = 0x200, scoped, tag = 'prefetched SMEM operand 0']
  #allocation4 [shape = 'u8[512]{0}', space=smem, size = 0x200, scoped, tag = 'prefetched SMEM operand 1']
  %s0 = inlined_call_operand.hbm [shape: f32[8], index: 0, kind: input, shape index: {}]
  %s1 = inlined_call_operand.hbm [shape: f32[2], index: 1, kind: input, shape index: {}]
  %s2 = inlined_call_operand.hbm [shape: f32[2,16,16], index: 2, kind: input, shape index: {}]
  %s3 = inlined_call_operand.vmem [shape: f32[2,2,15,15], index: 3, kind: output, shape index: {}]
  %s4 = sld [smem:[#allocation0]]
  $region18: #{tpu_custom_call.1} parent=0
    _
  %s6 = ssub.s32 1, %s4
  %s7 = scalar_select 0, %s6, %s4
  %s9 = sshll.u32 %s0, 4
  %s10 = int_to_ptr.hbm [resolvable:$true] %s9
  %12 = dma.hbm_to_smem %s10, 16, [#allocation3], [#allocation2]
  %s14 = sshll.u32 %s1, 4
  %s15 = int_to_ptr.hbm [resolvable:$true] %s14
  %17 = dma.hbm_to_smem %s15, 16, [#allocation4], [#allocation2]
  %19 = dma.done [#allocation2], 32
  %20 = sfence
  $region1: #{tpu_custom_call.1} parent=0
    #allocation5 [shape = 'u8[16384]{0}', space=vmem, size = 0x4000, scoped, tag = 'input window, operand 2, single buffered']
    #allocation6 [shape = 's32[1]{0}', space=sflag, size = 0x4, scoped, tag = 'scoped memory for tpu_custom_call.1']
    %21 = vsyncpa [#allocation6], 0
    // Predicated region
    $region2: #{tpu_custom_call.1} parent=1 // pred_check
      _
    $region3: #{tpu_custom_call.1} parent=1 // pred_check_branch
      %23 = sbr.rel (0) target = $region5
    $region4: #{tpu_custom_call.1} parent=1 // pred_region
      %25 = vsyncadd [#allocation6], 0
      %s26 = sshll.u32 %s2, 4
      %s27 = int_to_ptr.hbm [resolvable:$true] %s26
      %s28 = sshll.u32 [#allocation5], 4
      %s29 = int_to_ptr.vmem [resolvable:$true] %s28
      %34 = dma.hbm_to_vmem [thread:$0]  %s27, 512, %s29, [#allocation6], 128, 128, 8
    $region5: #{tpu_custom_call.1} parent=1 // pred_fallthru
      _
    // Predicated region
    $region6: #{tpu_custom_call.1} parent=1 // pred_check
      _
    $region7: #{tpu_custom_call.1} parent=1 // pred_check_branch
      %36 = sbr.rel (0) target = $region9
    $region8: #{tpu_custom_call.1} parent=1 // pred_region
      %38 = dma.done [#allocation6], 512
    $region9: #{tpu_custom_call.1} parent=1 // pred_fallthru
      _
    %v39 = vld [vmem:[#allocation5] sm:$0xff]
    %v40 = vld [vmem:[#allocation5 + $0x8] sm:$0xff]
    %v41 = vld [vmem:[#allocation5 + $0x10] sm:$0xff]
    %v42 = vld [vmem:[#allocation5 + $0x18] sm:$0xff]
    %s43 = sld [smem:[#allocation3]]
    %s44 = sld [smem:[#allocation3 + $0x1]]
    %s45 = sld [smem:[#allocation3 + $0x2]]
    %s46 = sld [smem:[#allocation3 + $0x3]]
    %s47 = sld [smem:[#allocation3 + $0x4]]
    %s48 = sld [smem:[#allocation3 + $0x5]]
    %s49 = sld [smem:[#allocation3 + $0x6]]
    %s50 = sld [smem:[#allocation3 + $0x7]]
    %s51 = sld [smem:[#allocation4]]
    %s52 = sld [smem:[#allocation4 + $0x1]]
    %v53 = vstv %s51
    %v54 = vstv %s43
    %v55 = vmul.f32 %v39, %v54
    %v56 = vmul.f32 %v40, %v54
    %v57 = vmul.f32 %v41, %v54
    %v58 = vmul.f32 %v42, %v54
    %v59 = vadd.f32 %v53, %v55
    %v60 = vadd.f32 %v53, %v56
    %v61 = vadd.f32 %v53, %v57
    %v62 = vadd.f32 %v53, %v58
    %v63 = vstv %s44
    %v64 = vmul.f32 %v39, %v63
    %v65 = vmul.f32 %v40, %v63
    %v66 = vmul.f32 %v41, %v63
    %v67 = vmul.f32 %v42, %v63
    %72 = vrot.lane.b32.xlu0 %v64, 127
    %v73 = vpop.permute.xlu0 %72
    %74 = vrot.lane.b32.xlu0 %v65, 127
    %v75 = vpop.permute.xlu0 %74
    %76 = vrot.lane.b32.xlu0 %v66, 127
    %v77 = vpop.permute.xlu0 %76
    %78 = vrot.lane.b32.xlu0 %v67, 127
    %v79 = vpop.permute.xlu0 %78
    %v84 = vadd.f32 %v59, %v73
    %v85 = vadd.f32 %v60, %v75
    %v86 = vadd.f32 %v61, %v77
    %v87 = vadd.f32 %v62, %v79
    %v88 = vstv %s45
    %v89 = vmul.f32 %v39, %v88
    %v90 = vmul.f32 %v40, %v88
    %v91 = vmul.f32 %v41, %v88
    %v92 = vmul.f32 %v42, %v88
    %vm97 = vcmask 1046528
    %v98 = vrot.slane %v89, 1
    %v99 = vrot.slane %v90, 1
    %v100 = vsel %vm97, %v98, %v99
    %v101 = vrot.slane %v91, 1
    %v102 = vrot.slane %v92, 1
    %v103 = vsel %vm97, %v101, %v102
    %v108 = vadd.f32 %v84, %v100
    %v109 = vadd.f32 %v85, %v99
    %v110 = vadd.f32 %v86, %v103
    %v111 = vadd.f32 %v87, %v102
    %v112 = vstv %s46
    %v113 = vmul.f32 %v39, %v112
    %v114 = vmul.f32 %v40, %v112
    %v115 = vmul.f32 %v41, %v112
    %v116 = vmul.f32 %v42, %v112
    %v121 = vrot.slane %v113, 1
    %v122 = vrot.slane %v114, 1
    %v123 = vsel %vm97, %v121, %v122
    %v124 = vrot.slane %v115, 1
    %v125 = vrot.slane %v116, 1
    %v126 = vsel %vm97, %v124, %v125
    %127 = vrot.lane.b32.xlu0 %v123, 127
    %v128 = vpop.permute.xlu0 %127
    %129 = vrot.lane.b32.xlu0 %v122, 127
    %v130 = vpop.permute.xlu0 %129
    %131 = vrot.lane.b32.xlu0 %v126, 127
    %v132 = vpop.permute.xlu0 %131
    %133 = vrot.lane.b32.xlu0 %v125, 127
    %v134 = vpop.permute.xlu0 %133
    %v139 = vadd.f32 %v108, %v128
    %v140 = vadd.f32 %v109, %v130
    %v141 = vadd.f32 %v110, %v132
    %v142 = vadd.f32 %v111, %v134
    %vm143 = vcmask 121856
    %144 = vst.msk [vmem:[%s3] sm:$0xff] %vm143, %v139
    %vm145 = vcmask 120832
    %146 = vst.msk [vmem:[%s3 + $0x8] sm:$0x7f] %vm145, %v140
    %147 = vst.msk [vmem:[%s3 + $0x20] sm:$0xff] %vm143, %v141
    %148 = vst.msk [vmem:[%s3 + $0x28] sm:$0x7f] %vm145, %v142
    %v149 = vstv %s52
    %v150 = vstv %s47
    %v151 = vmul.f32 %v39, %v150
    %v152 = vmul.f32 %v40, %v150
    %v153 = vmul.f32 %v41, %v150
    %v154 = vmul.f32 %v42, %v150
    %v155 = vadd.f32 %v149, %v151
    %v156 = vadd.f32 %v149, %v152
    %v157 = vadd.f32 %v149, %v153
    %v158 = vadd.f32 %v149, %v154
    %v159 = vstv %s48
    %v160 = vmul.f32 %v39, %v159
    %v161 = vmul.f32 %v40, %v159
    %v162 = vmul.f32 %v41, %v159
    %v163 = vmul.f32 %v42, %v159
    %168 = vrot.lane.b32.xlu0 %v160, 127
    %v169 = vpop.permute.xlu0 %168
    %170 = vrot.lane.b32.xlu0 %v161, 127
    %v171 = vpop.permute.xlu0 %170
    %172 = vrot.lane.b32.xlu0 %v162, 127
    %v173 = vpop.permute.xlu0 %172
    %174 = vrot.lane.b32.xlu0 %v163, 127
    %v175 = vpop.permute.xlu0 %174
    %v180 = vadd.f32 %v155, %v169
    %v181 = vadd.f32 %v156, %v171
    %v182 = vadd.f32 %v157, %v173
    %v183 = vadd.f32 %v158, %v175
    %v184 = vstv %s49
    %v185 = vmul.f32 %v39, %v184
    %v186 = vmul.f32 %v40, %v184
    %v187 = vmul.f32 %v41, %v184
    %v188 = vmul.f32 %v42, %v184
    %v193 = vrot.slane %v185, 1
    %v194 = vrot.slane %v186, 1
    %v195 = vsel %vm97, %v193, %v194
    %v196 = vrot.slane %v187, 1
    %v197 = vrot.slane %v188, 1
    %v198 = vsel %vm97, %v196, %v197
    %v203 = vadd.f32 %v180, %v195
    %v204 = vadd.f32 %v181, %v194
    %v205 = vadd.f32 %v182, %v198
    %v206 = vadd.f32 %v183, %v197
    %v207 = vstv %s50
    %v208 = vmul.f32 %v39, %v207
    %v209 = vmul.f32 %v40, %v207
    %v210 = vmul.f32 %v41, %v207
    %v211 = vmul.f32 %v42, %v207
    %v216 = vrot.slane %v208, 1
    %v217 = vrot.slane %v209, 1
    %v218 = vsel %vm97, %v216, %v217
    %v219 = vrot.slane %v210, 1
    %v220 = vrot.slane %v211, 1
    %v221 = vsel %vm97, %v219, %v220
    %222 = vrot.lane.b32.xlu0 %v218, 127
    %v223 = vpop.permute.xlu0 %222
    %224 = vrot.lane.b32.xlu0 %v217, 127
    %v225 = vpop.permute.xlu0 %224
    %226 = vrot.lane.b32.xlu0 %v221, 127
    %v227 = vpop.permute.xlu0 %226
    %228 = vrot.lane.b32.xlu0 %v220, 127
    %v229 = vpop.permute.xlu0 %228
    %v234 = vadd.f32 %v203, %v223
    %v235 = vadd.f32 %v204, %v225
    %v236 = vadd.f32 %v205, %v227
    %v237 = vadd.f32 %v206, %v229
    %s238 = scalar_lea.vmem %s3, 16
    %239 = vst.msk [vmem:[%s238] sm:$0xff] %vm143, %v234
    %240 = vst.msk [vmem:[%s238 + $0x8] sm:$0x7f] %vm145, %v235
    %241 = vst.msk [vmem:[%s238 + $0x20] sm:$0xff] %vm143, %v236
    %242 = vst.msk [vmem:[%s238 + $0x28] sm:$0x7f] %vm145, %v237
    // Predicated region
    $region10: #{tpu_custom_call.1} parent=1 // pred_check
      _
    $region11: #{tpu_custom_call.1} parent=1 // pred_check_branch
      %244 = sbr.rel (0) target = $region13
    $region12: #{tpu_custom_call.1} parent=1 // pred_region
      _
    $region13: #{tpu_custom_call.1} parent=1 // pred_fallthru
      _
    // Predicated region
    $region14: #{tpu_custom_call.1} parent=1 // pred_check
      _
    $region15: #{tpu_custom_call.1} parent=1 // pred_check_branch
      %246 = sbr.rel (0) target = $region17
    $region16: #{tpu_custom_call.1} parent=1 // pred_region
      _
    $region17: #{tpu_custom_call.1} parent=1 // pred_fallthru
      _
    %247 = vsyncpa [#allocation6], 1

</llo_original>
